<compile_context>
chip_gen: v7x
topology: tpu7x:2x2x1
jax: 0.10.0
libtpu: 0.0.40
codegen_flags: <defaults>
</compile_context>

<pallas_src>
import functools

import jax
import jax.numpy as jnp
from jax import lax
from jax.experimental import pallas as pl
from jax.experimental.pallas import tpu as pltpu


def _round_up(x, m):
    return (x + m - 1) // m * m


@functools.lru_cache(maxsize=None)
def _roll_is_jnp_roll():
    """Probe pltpu.roll's direction convention once on the real backend.

    True  -> pltpu.roll matches jnp.roll (result[i] = x[(i - shift) % n])
    False -> opposite convention       (result[i] = x[(i + shift) % n])
    The depthwise taps need result[i] = x[i + kw]; the kernel picks the shift
    accordingly, so either convention produces a correct kernel.
    """
    def k(x_ref, o_ref):
        o_ref[...] = pltpu.roll(x_ref[...], 1, 0)

    x = jnp.arange(8 * 128, dtype=jnp.float32).reshape(8, 128)
    y = pl.pallas_call(k, out_shape=jax.ShapeDtypeStruct((8, 128), jnp.float32))(x)
    return bool(y[1, 0] == x[0, 0])


def _vmem_limit_bytes():
    """Generation-aware scoped-VMEM request: ~96 MiB on 128 MiB parts (v5e/v6e),
    ~48 MiB on v7x (64 MiB physical), 48 MiB fallback."""
    cap = 64 * 1024 * 1024
    try:
        cap = int(getattr(pltpu.get_tpu_info(), "vmem_capacity_bytes", cap)) or cap
    except Exception:
        pass
    return max(32 * 1024 * 1024, min(cap - 16 * 1024 * 1024, 96 * 1024 * 1024))


def _pick_tile_rows(Ho, W, Hp, stride, n_batch, vmem_budget):
    """Largest output-row tile TH that divides Ho and fits the VMEM budget."""
    best = 1
    for d in range(1, Ho + 1):
        if Ho % d:
            continue
        if n_batch == 1 and Ho > 1 and d == Ho:
            continue            # keep >= 2 grid points so both v7x TCs get work
        if stride == 2 and d > 32:
            continue            # bounds the per-kh row-compaction concat
        if d * W > 4096:
            continue            # keep MXU M-dim / f32 temporaries sane
        rows_in = (d - 1) * stride + 3
        work = (rows_in + 3 * d) * W * Hp * 4      # f32 h + acc + tap temporaries
        if work <= vmem_budget // 4:
            best = d
    return best


# ------------------------------ fused kernel -------------------------------

def _fused_kernel(*refs, W, TH, stride, expand, roll_np):
    """One (batch image, TH-output-row tile) step of the inverted residual.

    refs (expand=True):  x, w1, b1, wdw, b2, w3, b3, out
    refs (expand=False): x,          wdw, b2, w3, b3, out

    x   : (1, H, W, Cp)  bf16  padded NHWC input image (resident across tiles)
    w1  : (Cp, Hp)       bf16  1x1 expansion weights, BN scale folded in
    wdw : (9, Hp)        f32   depthwise taps (kh*3+kw major), BN folded in
    w3  : (Hp, Op)       bf16  1x1 projection weights, BN scale folded in
    b*  : (1, .)         f32   folded BN biases
    out : (1, TH, W, Op) bf16  dense output slab (columns >= Wo are garbage and
                               are cropped in the XLA wrapper)
    """
    if expand:
        x_ref, w1_ref, b1_ref, wdw_ref, b2_ref, w3_ref, b3_ref, o_ref = refs
    else:
        x_ref, wdw_ref, b2_ref, w3_ref, b3_ref, o_ref = refs

    Hp = wdw_ref.shape[1]
    rows_in = (TH - 1) * stride + 3                    # input rows feeding tile
    t = pl.program_id(1)
    row0 = pl.multiple_of(t * (TH * stride), TH * stride)

    # ---- stage 0: slice this tile's input-row window out of the resident image
    xw = x_ref[0, pl.ds(row0, rows_in), :, :]          # (rows_in, W, Cp) bf16
    xm = xw.reshape(rows_in * W, xw.shape[-1])

    # ---- stage 1: 1x1 expansion (bf16 MXU, f32 acc) + folded BN + ReLU6
    if expand:
        h = jnp.dot(xm, w1_ref[...], preferred_element_type=jnp.float32)
        h = jnp.clip(h + b1_ref[...], 0.0, 6.0)        # (rows_in*W, Hp) f32
    else:
        h = xm.astype(jnp.float32)                     # hidden == input channels

    n = TH * W

    def row_block(kh):
        # Rows of h feeding depthwise tap row kh, flattened to (TH*W, Hp).
        if stride == 1:
            return h[kh * W:(kh + TH) * W, :]          # W-aligned contiguous slice
        # stride 2: compact rows kh, kh+2, ..., kh+2(TH-1) (aligned slices + concat)
        return jnp.concatenate(
            [h[(kh + 2 * r) * W:(kh + 2 * r + 1) * W, :] for r in range(TH)],
            axis=0)

    # ---- stage 2: depthwise 3x3 (f32 VPU); kw shifts via XLU rolls.  Wrapped
    # columns only ever land at c >= Wo, which the wrapper drops.
    acc = None
    for kh in range(3):
        rb = row_block(kh)                             # (TH*W, Hp) f32
        for kw in range(3):
            if kw == 0:
                tap = rb
            else:
                shift = (n - kw) if roll_np else kw
                tap = pltpu.roll(rb, shift, 0)
            w = wdw_ref[3 * kh + kw:3 * kh + kw + 1, :]        # (1, Hp) f32
            term = tap * w
            acc = (term + b2_ref[...]) if acc is None else (acc + term)
    d = jnp.clip(acc, 0.0, 6.0)                        # (TH*W, Hp) f32

    # ---- stage 3: 1x1 projection (bf16 MXU, f32 acc) + folded BN
    y = jnp.dot(d.astype(jnp.bfloat16), w3_ref[...],
                preferred_element_type=jnp.float32) + b3_ref[...]
    o_ref[0, :, :, :] = y.reshape(TH, W, -1).astype(o_ref.dtype)


def _fused_call(x_p, weights, *, N, H, W, stride, expand, TH, Ho, vmem_limit):
    Cp = x_p.shape[-1]
    Hp = weights[-2].shape[0]       # w3 rows
    Op = weights[-2].shape[1]
    T = Ho // TH
    kernel = functools.partial(_fused_kernel, W=W, TH=TH, stride=stride,
                               expand=expand, roll_np=_roll_is_jnp_roll())

    def const(shape):
        return pl.BlockSpec(shape, lambda n, t: (0,) * len(shape))

    in_specs = [pl.BlockSpec((1, H, W, Cp), lambda n, t: (n, 0, 0, 0))]
    if expand:
        in_specs += [const((Cp, Hp)), const((1, Hp))]
    in_specs += [const((9, Hp)), const((1, Hp)), const((Hp, Op)), const((1, Op))]

    return pl.pallas_call(
        kernel,
        out_shape=jax.ShapeDtypeStruct((N, Ho, W, Op), jnp.bfloat16),
        grid=(N, T),
        in_specs=in_specs,
        out_specs=pl.BlockSpec((1, TH, W, Op), lambda n, t: (n, t, 0, 0)),
        compiler_params=pltpu.CompilerParams(
            dimension_semantics=("parallel", "parallel"),
            vmem_limit_bytes=vmem_limit),
    )(x_p, *weights)


# ------------------------------ module wrapper ------------------------------

def inverted_residual_forward(x_nchw, params, *, input_dim, output_dim,
                              stride, expansion):
    hidden = int(round(input_dim * expansion))
    expand = expansion != 1
    use_res_connect = (stride == 1 and input_dim == output_dim)
    N, Cin, H, W = x_nchw.shape
    assert Cin == input_dim

    Cp = _round_up(input_dim, 128)
    Hp = _round_up(hidden, 128)
    Op = _round_up(output_dim, 128)
    Ho = (H - 3) // stride + 1
    Wo = (W - 3) // stride + 1

    vmem_limit = _vmem_limit_bytes()
    TH = _pick_tile_rows(Ho, W, Hp, stride, N, vmem_limit)

    # NCHW -> NHWC bf16, channel padding to a multiple of 128 (lane-dense).
    x_nhwc = jnp.transpose(x_nchw, (0, 2, 3, 1)).astype(jnp.bfloat16)
    x_p = jnp.pad(x_nhwc, ((0, 0), (0, 0), (0, 0), (0, Cp - input_dim)))

    def pad2(a, r, c, dtype):
        a = jnp.asarray(a, jnp.float32)
        return jnp.pad(a, ((0, r - a.shape[0]), (0, c - a.shape[1]))).astype(dtype)

    weights = []
    if expand:
        w1 = params["w1"].reshape(hidden, input_dim).T * params["s1"]   # BN fold
        weights += [pad2(w1, Cp, Hp, jnp.bfloat16),
                    pad2(params["b1"], 1, Hp, jnp.float32)]
    wdw = params["wdw"].reshape(hidden, 9).T * params["s2"]             # BN fold
    weights += [pad2(wdw, 9, Hp, jnp.float32),
                pad2(params["b2"], 1, Hp, jnp.float32)]
    w3 = params["w3"].reshape(output_dim, hidden).T * params["s3"]      # BN fold
    weights += [pad2(w3, Hp, Op, jnp.bfloat16),
                pad2(params["b3"], 1, Op, jnp.float32)]

    out_p = _fused_call(x_p, weights, N=N, H=H, W=W, stride=stride,
                        expand=expand, TH=TH, Ho=Ho, vmem_limit=vmem_limit)

    # Dense-slab crop happens here in XLA (keeps the kernel stores unmasked):
    # drop garbage columns (stride 1) / subsample valid even columns (stride 2)
    # and drop the padded channels.
    if stride == 1:
        out = out_p[:, :, :Wo, :output_dim]
    else:
        out = out_p[:, :, :2 * Wo:2, :output_dim]
    out = out.astype(jnp.float32).transpose(0, 3, 1, 2)

    if use_res_connect:
        # TODO(synk): with the reference's padding=0 depthwise conv the output is
        # (H-2, W-2), so this add can never be shape-valid; the PyTorch module
        # has the same latent bug.  Kept for fidelity, never exercisable.
        out = x_nchw + out
    return out


# ----------------------- deterministic parameter init ----------------------

def _bn_fold(key, c):
    k1, k2, k3, k4 = jax.random.split(key, 4)
    gamma = jax.random.uniform(k1, (c,), jnp.float32, 0.5, 1.5)
    beta = 0.1 * jax.random.normal(k2, (c,), jnp.float32)
    mean = 0.1 * jax.random.normal(k3, (c,), jnp.float32)
    var = jax.random.uniform(k4, (c,), jnp.float32, 0.5, 1.5)
    scale = gamma / jnp.sqrt(var + 1e-5)
    bias = beta - mean * scale
    return scale.reshape(1, c), bias.reshape(1, c)


def make_params(key, input_dim, output_dim, expansion):
    hidden = int(round(input_dim * expansion))
    ks = jax.random.split(key, 6)
    p = {}
    if expansion != 1:
        p["w1"] = 0.1 * jax.random.normal(ks[0], (hidden, input_dim, 1, 1),
                                          jnp.float32)
        p["s1"], p["b1"] = _bn_fold(ks[1], hidden)
    p["wdw"] = 0.1 * jax.random.normal(ks[2], (hidden, 1, 3, 3), jnp.float32)
    p["s2"], p["b2"] = _bn_fold(ks[3], hidden)
    p["w3"] = 0.1 * jax.random.normal(ks[4], (output_dim, hidden, 1, 1),
                                      jnp.float32)
    p["s3"], p["b3"] = _bn_fold(ks[5], output_dim)
    return p


# ----------------------------- pure-JAX reference --------------------------

def reference_forward(x, params, *, input_dim, output_dim, stride, expansion):
    hidden = int(round(input_dim * expansion))
    dn = ("NCHW", "OIHW", "NCHW")
    y = x
    if expansion != 1:
        y = lax.conv_general_dilated(y, params["w1"], (1, 1), "VALID",
                                     dimension_numbers=dn)
        y = y * params["s1"].reshape(1, -1, 1, 1) + params["b1"].reshape(1, -1, 1, 1)
        y = jnp.clip(y, 0.0, 6.0)
    y = lax.conv_general_dilated(y, params["wdw"], (stride, stride), "VALID",
                                 dimension_numbers=dn,
                                 feature_group_count=hidden)
    y = y * params["s2"].reshape(1, -1, 1, 1) + params["b2"].reshape(1, -1, 1, 1)
    y = jnp.clip(y, 0.0, 6.0)
    y = lax.conv_general_dilated(y, params["w3"], (1, 1), "VALID",
                                 dimension_numbers=dn)
    y = y * params["s3"].reshape(1, -1, 1, 1) + params["b3"].reshape(1, -1, 1, 1)
    if stride == 1 and input_dim == output_dim:
        y = x + y
    return y


# ---------------------------------- main -----------------------------------

if __name__ == "__main__":
    key = jax.random.PRNGKey(0)
    N, H, W = 2, 16, 16

    configs = [
        # (input_dim, output_dim, stride, expansion)
        (8, 16, 1, 2),    # expansion branch (hidden=16), stride 1
        (16, 24, 1, 1),   # expansion == 1 branch, stride 1
        (8, 16, 2, 6),    # expansion branch (hidden=48), stride 2
    ]

    for i, (cin, cout, stride, expansion) in enumerate(configs):
        kx, kp = jax.random.split(jax.random.fold_in(key, i))
        x = jax.random.normal(kx, (N, cin, H, W), jnp.float32)
        params = make_params(kp, cin, cout, expansion)

        out = inverted_residual_forward(x, params, input_dim=cin,
                                        output_dim=cout, stride=stride,
                                        expansion=expansion)
        out = jax.block_until_ready(out)

        ref = reference_forward(x, params, input_dim=cin, output_dim=cout,
                                stride=stride, expansion=expansion)
        assert out.shape == ref.shape, (out.shape, ref.shape)
        # bf16 MXU operands + bf16 I/O vs an all-f32 reference -> relaxed tolerance.
        assert jnp.allclose(out, ref, atol=3e-2, rtol=3e-2), \
            f"mismatch vs reference for config {i}"

    print("KERNEL_OK")
</pallas_src>

<mosaic_0001>
module attributes {stable_mosaic.version = 11 : i64} {
  func.func @k(%arg0: memref<8x128xf32, #tpu.memory_space<vmem>>, %arg1: memref<8x128xf32, #tpu.memory_space<vmem>>) attributes {dimension_semantics = [], scalar_prefetch = 0 : i64, scratch_operands = 0 : i64, tpu.core_type = #tpu.core_type<tc>} {
    %c0 = arith.constant 0 : index
    %c0_0 = arith.constant 0 : index
    %0 = vector.load %arg0[%c0, %c0_0] : memref<8x128xf32, #tpu.memory_space<vmem>>, vector<8x128xf32>
    %c1_i32 = arith.constant 1 : i32
    %1 = tpu.dynamic_rotate %0 by %c1_i32 dim 0 : vector<8x128xf32>, i32 -> vector<8x128xf32>
    %c0_1 = arith.constant 0 : index
    %c0_2 = arith.constant 0 : index
    %2 = vector.load %arg1[%c0_1, %c0_2] : memref<8x128xf32, #tpu.memory_space<vmem>>, vector<8x128xf32>
    tpu.vector_store %arg1[%c0_1, %c0_2], %1 {strides = array<i32>} : memref<8x128xf32, #tpu.memory_space<vmem>>, vector<8x128xf32>,
    return
  }
}

</mosaic_0001>

<llo_original>
// kernel: tpu_custom_call.1
$region0: #{tpu_custom_call.1}
  #allocation0 [shape = 'u32[]', space=smem, size = 0x4, offset = 0x4, fixed_abs, tag = 'smem constant byte address 0x4 - core index']
  #allocation1 [shape = 'u32[144,128]{1,0:T(1,128)}', space=vmem, size = 0x12000, scoped, tag = 'internal scratch']
  %s0 = inlined_call_operand.hbm [shape: f32[8,128], index: 0, kind: input, shape index: {}]
  %s1 = inlined_call_operand.hbm [shape: f32[8,128], index: 1, kind: output, shape index: {}]
  %s2 = sld [smem:[#allocation0]]
  $region18: #{tpu_custom_call.1} parent=0
    _
  %s4 = ssub.s32 1, %s2
  %s5 = scalar_select 0, %s4, %s2
  $region1: #{tpu_custom_call.1} parent=0
    #allocation2 [shape = 'u8[4096]{0}', space=vmem, size = 0x1000, scoped, tag = 'input window, operand 0, single buffered']
    #allocation3 [shape = 's32[1]{0}', space=sflag, size = 0x4, scoped, tag = 'scoped memory for tpu_custom_call.1']
    #allocation4 [shape = 's32[1]{0}', space=sflag, size = 0x4, scoped, tag = 'scoped memory for tpu_custom_call.1']
    #allocation5 [shape = 'u8[4096]{0}', space=vmem, size = 0x1000, scoped, tag = 'output window, operand 0, single buffered']
    %6 = vsyncpa [#allocation3], 0
    %7 = vsyncpa [#allocation4], 0
    // Predicated region
    $region2: #{tpu_custom_call.1} parent=1 // pred_check
      _
    $region3: #{tpu_custom_call.1} parent=1 // pred_check_branch
      %9 = sbr.rel (0) target = $region5
    $region4: #{tpu_custom_call.1} parent=1 // pred_region
      %s11 = ssub.s32 128, 128
      %12 = vsyncadd [#allocation3], %s11
      %s14 = sshll.u32 [#allocation2], 4
      %s15 = int_to_ptr.vmem [resolvable:$true] %s14
      %17 = dma.hbm_to_vmem [thread:$0]  %s0, 128, %s15, [#allocation3]
    $region5: #{tpu_custom_call.1} parent=1 // pred_fallthru
      _
    // Predicated region
    $region6: #{tpu_custom_call.1} parent=1 // pred_check
      _
    $region7: #{tpu_custom_call.1} parent=1 // pred_check_branch
      %19 = sbr.rel (0) target = $region9
    $region8: #{tpu_custom_call.1} parent=1 // pred_region
      %20 = dma.done [#allocation3], 128
    $region9: #{tpu_custom_call.1} parent=1 // pred_fallthru
      _
    %v21 = vld [vmem:[#allocation2] sm:$0xff]
    %v22 = vrot.slane %v21, 7
    %23 = vst [vmem:[#allocation5] sm:$0xff] %v22
    // Predicated region
    $region10: #{tpu_custom_call.1} parent=1 // pred_check
      _
    $region11: #{tpu_custom_call.1} parent=1 // pred_check_branch
      %25 = sbr.rel (0) target = $region13
    $region12: #{tpu_custom_call.1} parent=1 // pred_region
      %s27 = ssub.s32 128, 128
      %28 = vsyncadd [#allocation4], %s27
      %s30 = sshll.u32 [#allocation5], 4
      %s31 = int_to_ptr.vmem [resolvable:$true] %s30
      %33 = dma.vmem_to_hbm [thread:$0]  %s31, 128, %s1, [#allocation4]
    $region13: #{tpu_custom_call.1} parent=1 // pred_fallthru
      _
    // Predicated region
    $region14: #{tpu_custom_call.1} parent=1 // pred_check
      _
    $region15: #{tpu_custom_call.1} parent=1 // pred_check_branch
      %35 = sbr.rel (0) target = $region17
    $region16: #{tpu_custom_call.1} parent=1 // pred_region
      %36 = dma.done [#allocation4], 128
    $region17: #{tpu_custom_call.1} parent=1 // pred_fallthru
      _
    %37 = vsyncpa [#allocation3], 1
    %38 = vsyncpa [#allocation4], 1

</llo_original>
